<compile_context>
chip_gen: v5e
topology: v5e:2x2
jax: 0.10.0
libtpu: 0.0.40
codegen_flags: <defaults>
</compile_context>

<pallas_src>
import jax
import jax.numpy as jnp
from jax.experimental import pallas as pl
from jax.experimental.pallas import tpu as pltpu


def _round_up(x, m):
    return (x + m - 1) // m * m


def _proj_kernel(p_ref, w_ref, bp_ref, o_ref):
    # p_ref: (TM, K_pad)   w_ref: (K_pad, E)   bp_ref: (TM, E) f32
    # o_ref: (TM, E)  -- dtype follows compute/out dtype, accumulation is f32.
    acc = jnp.dot(p_ref[...], w_ref[...], preferred_element_type=jnp.float32)
    o_ref[...] = (acc + bp_ref[...]).astype(o_ref.dtype)


# Conservative per-call VMEM budget for tile selection; leaves headroom on
# v7x (64 MiB physical) and is far below v5e/v6e's 128 MiB physical.
_VMEM_BUDGET = 40 * 1024 * 1024


def patch_embedding(x, conv_w, conv_b, cls_token, positions, patch_size, *,
                    row_tile=512, compute_dtype=jnp.float32, out_dtype=None):
    """x: (B, C, H, W) float32, NCHW (PyTorch convention).

    Returns (B, N+1, E) with the same semantics as the PyTorch module.
    For real ViT sizes pass compute_dtype=jnp.bfloat16 on *all* generations
    (v5e/v6e/v7x): it halves both the patch read and the output writeback of
    a memory-bound kernel while the dot still accumulates in f32.
    """
    B, C, H, W = x.shape
    P = patch_size
    E = conv_w.shape[0]
    nh, nw = H // P, W // P
    N = nh * nw
    K = C * P * P
    rows = B * N
    out_dtype = compute_dtype if out_dtype is None else out_dtype

    # ---- patchify (one HBM pass: the transpose; the K-pad fuses into it) ----
    # TODO(synk): fuse this NCHW -> (B*N, K) patchify into the pallas_call
    # (block (1, C, H, W) per image + in-kernel relayout, or manual strided
    # make_async_copy) to remove this extra HBM pass (~1.5-2x on ViT shapes).
    patches = x.reshape(B, C, nh, P, nw, P)
    patches = patches.transpose(0, 2, 4, 1, 3, 5).reshape(rows, K)
    patches = patches.astype(compute_dtype)
    w_mat = conv_w.reshape(E, K).T.astype(compute_dtype)

    K_pad = _round_up(K, 128)
    if K_pad != K:
        patches = jnp.pad(patches, ((0, 0), (0, K_pad - K)))
        w_mat = jnp.pad(w_mat, ((0, K_pad - K), (0, 0)))

    in_b = jnp.dtype(compute_dtype).itemsize
    out_b = jnp.dtype(out_dtype).itemsize
    w_bytes = K_pad * E * in_b                              # single-buffered
    per_row = 2 * K_pad * in_b + 2 * E * out_b + 4 * E      # dbuf in/out + bias

    def _fits(n_rows):
        return w_bytes + n_rows * per_row <= _VMEM_BUDGET

    # Prefer row tiles that cover whole batch elements (TM = m * N) so the
    # positional-embedding add can be fused into the kernel.
    m = None
    m_target = min(B, max(1, row_tile // max(N, 1)))
    for cand in range(m_target, 0, -1):
        if (cand * N) % 8 == 0 and _fits(cand * N):
            m = cand
            break
    if m is None:  # e.g. odd N: search upward for an aligned tile that fits
        for cand in range(1, B + 1):
            if (cand * N) % 8 == 0 and _fits(cand * N):
                m = cand
                break

    if m is not None:
        TM = m * N
        bias_pos = jnp.tile(
            (positions[1:].reshape(N, E) + conv_b.reshape(1, E)).astype(jnp.float32),
            (m, 1))
        fused = True
    else:
        # Fallback: plain 8-aligned row tile; bias/positions added in epilogue.
        cap = max(8, (_VMEM_BUDGET - w_bytes) // per_row)
        TM = (min(row_tile, rows, cap) // 8) * 8
        if TM == 0:
            TM = rows                       # rows < 8 -> full-extent block
        bias_pos = jnp.zeros((TM, E), jnp.float32)
        fused = False

    grid = (pl.cdiv(rows, TM),)
    vmem_limit = min(48 * 1024 * 1024,
                     max(16 * 1024 * 1024, w_bytes + TM * per_row + (4 << 20)))

    proj = pl.pallas_call(
        _proj_kernel,
        out_shape=jax.ShapeDtypeStruct((rows, E), out_dtype),
        grid_spec=pltpu.PrefetchScalarGridSpec(
            num_scalar_prefetch=0,
            grid=grid,
            in_specs=[
                pl.BlockSpec((TM, K_pad), lambda i: (i, 0)),
                # Constant-index blocks: stay resident in VMEM, single-buffered.
                pl.BlockSpec((K_pad, E), lambda i: (0, 0),
                             pipeline_mode=pl.Buffered(1)),
                pl.BlockSpec((TM, E), lambda i: (0, 0),
                             pipeline_mode=pl.Buffered(1)),
            ],
            out_specs=pl.BlockSpec((TM, E), lambda i: (i, 0)),
        ),
        compiler_params=pltpu.CompilerParams(
            # TODO(synk): on v7x use pltpu.CORE_PARALLEL here (or pl.core_map
            # over create_tensorcore_mesh) to split row tiles across both TCs.
            dimension_semantics=("parallel",),
            vmem_limit_bytes=int(vmem_limit),
        ),
    )(patches, w_mat, bias_pos)

    # ---- epilogue: single output-sized copy (cls-token prepend) -------------
    proj = proj.reshape(B, N, E)
    if not fused:
        proj = proj + (positions[1:].reshape(N, E)
                       + conv_b.reshape(1, E)).astype(proj.dtype)
    cls_row = cls_token.reshape(1, 1, E) + positions[0].reshape(1, 1, E)
    cls_b = jnp.broadcast_to(cls_row, (B, 1, E)).astype(proj.dtype)
    return jnp.concatenate([cls_b, proj], axis=1)


if __name__ == "__main__":
    # Small shapes consistent with the module:
    # in_channels=4, patch_size=4, emb_size=32, img_size=16 -> N = (16/4)^2 = 16
    B, C, P, E, IMG = 2, 4, 4, 32, 16
    N = (IMG // P) ** 2

    key = jax.random.PRNGKey(0)
    kx, kw, kb, kc, kp = jax.random.split(key, 5)
    x = jax.random.normal(kx, (B, C, IMG, IMG), dtype=jnp.float32)
    conv_w = jax.random.normal(kw, (E, C, P, P), dtype=jnp.float32) * 0.02
    conv_b = jax.random.normal(kb, (E,), dtype=jnp.float32) * 0.02
    cls_token = jax.random.normal(kc, (1, 1, E), dtype=jnp.float32)
    positions = jax.random.normal(kp, (N + 1, E), dtype=jnp.float32)

    out = patch_embedding(x, conv_w, conv_b, cls_token, positions, P)
    out = jax.block_until_ready(out)
    assert out.shape == (B, N + 1, E)

    # Pure-JAX reference (same patchify + matmul semantics as Conv2d stride=P).
    patches_ref = x.reshape(B, C, IMG // P, P, IMG // P, P)
    patches_ref = patches_ref.transpose(0, 2, 4, 1, 3, 5).reshape(B, N, C * P * P)
    proj_ref = patches_ref @ conv_w.reshape(E, -1).T + conv_b
    cls_ref = jnp.broadcast_to(cls_token, (B, 1, E))
    ref = jnp.concatenate([cls_ref, proj_ref], axis=1) + positions
    # NOTE: loosen tolerance (~2e-2) if compute_dtype=bfloat16 is used.
    assert jnp.allclose(out, ref, atol=1e-4, rtol=1e-4)

    print("KERNEL_OK")
</pallas_src>

<mosaic_0001>
module attributes {stable_mosaic.version = 11 : i64} {
  func.func @_proj_kernel(%arg0: i32, %arg1: memref<32x128xf32, #tpu.memory_space<vmem>>, %arg2: memref<128x32xf32, #tpu.memory_space<vmem>>, %arg3: memref<32x32xf32, #tpu.memory_space<vmem>>, %arg4: memref<32x32xf32, #tpu.memory_space<vmem>>) attributes {dimension_semantics = [#tpu.dimension_semantics<parallel>], iteration_bounds = array<i64: 1>, scalar_prefetch = 0 : i64, scratch_operands = 0 : i64, tpu.core_type = #tpu.core_type<tc>, window_params = [{transform_indices = @transform_0, window_bounds = array<i64: 32, 128>}, {pipeline_mode = #tpu.pipeline_mode<synchronous>, transform_indices = @transform_1, window_bounds = array<i64: 128, 32>}, {pipeline_mode = #tpu.pipeline_mode<synchronous>, transform_indices = @transform_2, window_bounds = array<i64: 32, 32>}, {transform_indices = @transform_3, window_bounds = array<i64: 32, 32>}]} {
    %c0 = arith.constant 0 : index
    %c0_0 = arith.constant 0 : index
    %0 = vector.load %arg1[%c0, %c0_0] : memref<32x128xf32, #tpu.memory_space<vmem>>, vector<32x128xf32>
    %c0_1 = arith.constant 0 : index
    %c0_2 = arith.constant 0 : index
    %1 = vector.load %arg2[%c0_1, %c0_2] : memref<128x32xf32, #tpu.memory_space<vmem>>, vector<128x32xf32>
    %cst = arith.constant dense<0.000000e+00> : vector<32x32xf32>
    %2 = tpu.matmul %0, %1, %cst {dimension_numbers = #tpu.dot_dimension_numbers<[1], [0], [0], [1], [0, 0, 1, 1], [], []>} : vector<32x128xf32>, vector<128x32xf32>, vector<32x32xf32> -> vector<32x32xf32>
    %c0_3 = arith.constant 0 : index
    %c0_4 = arith.constant 0 : index
    %3 = vector.load %arg3[%c0_3, %c0_4] : memref<32x32xf32, #tpu.memory_space<vmem>>, vector<32x32xf32>
    %4 = arith.addf %2, %3 : vector<32x32xf32>
    %c0_5 = arith.constant 0 : index
    %c0_6 = arith.constant 0 : index
    %5 = vector.load %arg4[%c0_5, %c0_6] : memref<32x32xf32, #tpu.memory_space<vmem>>, vector<32x32xf32>
    tpu.vector_store %arg4[%c0_5, %c0_6], %4 {strides = array<i32>} : memref<32x32xf32, #tpu.memory_space<vmem>>, vector<32x32xf32>,
    return
  }
  func.func @transform_0(%arg0: i32) -> (i32, i32) {
    %c0_i32 = arith.constant 0 : i32
    %c0_i32_0 = arith.constant 0 : i32
    return %arg0, %c0_i32 : i32, i32
  }
  func.func @transform_1(%arg0: i32) -> (i32, i32) {
    %c0_i32 = arith.constant 0 : i32
    %c0_i32_0 = arith.constant 0 : i32
    %c0_i32_1 = arith.constant 0 : i32
    return %c0_i32, %c0_i32_0 : i32, i32
  }
  func.func @transform_2(%arg0: i32) -> (i32, i32) {
    %c0_i32 = arith.constant 0 : i32
    %c0_i32_0 = arith.constant 0 : i32
    %c0_i32_1 = arith.constant 0 : i32
    return %c0_i32, %c0_i32_0 : i32, i32
  }
  func.func @transform_3(%arg0: i32) -> (i32, i32) {
    %c0_i32 = arith.constant 0 : i32
    %c0_i32_0 = arith.constant 0 : i32
    return %arg0, %c0_i32 : i32, i32
  }
}

</mosaic_0001>

<llo_original>
// kernel: tpu_custom_call.1
$region0: #{tpu_custom_call.1}
  #allocation0 [shape = 'u32[]', space=smem, size = 0x4, offset = 0x4, fixed_abs, tag = 'smem constant byte address 0x4 - core index']
  #allocation1 [shape = 'u32[72,128]{1,0:T(1,128)}', space=vmem, size = 0x9000, scoped, tag = 'internal scratch']
  %s0 = inlined_call_operand.vmem [shape: f32[32,128], index: 0, kind: input, shape index: {}]
  %s1 = inlined_call_operand.vmem [shape: f32[128,32], index: 1, kind: input, shape index: {}]
  %s2 = inlined_call_operand.vmem [shape: f32[32,32], index: 2, kind: input, shape index: {}]
  %s3 = inlined_call_operand.hbm [shape: f32[32,32], index: 3, kind: output, shape index: {}]
  %s4 = sld [smem:[#allocation0]]
  $region22: #{tpu_custom_call.1} parent=0
    _
  %s6 = ssub.s32 1, %s4
  %s7 = scalar_select 0, %s6, %s4
  $region1: #{tpu_custom_call.1} parent=0
    #allocation2 [shape = 'u8[16384]{0}', space=vmem, size = 0x4000, scoped, tag = 'output window, operand 0, single buffered']
    #allocation3 [shape = 's32[1]{0}', space=sflag, size = 0x4, scoped, tag = 'scoped memory for tpu_custom_call.1']
    %8 = vsyncpa [#allocation3], 0
    // Predicated region
    $region2: #{tpu_custom_call.1} parent=1 // pred_check
      _
    $region3: #{tpu_custom_call.1} parent=1 // pred_check_branch
      %10 = sbr.rel (0) target = $region5
    $region4: #{tpu_custom_call.1} parent=1 // pred_region
      _
    $region5: #{tpu_custom_call.1} parent=1 // pred_fallthru
      _
    // Predicated region
    $region6: #{tpu_custom_call.1} parent=1 // pred_check
      _
    $region7: #{tpu_custom_call.1} parent=1 // pred_check_branch
      %12 = sbr.rel (0) target = $region9
    $region8: #{tpu_custom_call.1} parent=1 // pred_region
      _
    $region9: #{tpu_custom_call.1} parent=1 // pred_fallthru
      _
    // Predicated region
    $region10: #{tpu_custom_call.1} parent=1 // pred_check
      _
    $region11: #{tpu_custom_call.1} parent=1 // pred_check_branch
      %14 = sbr.rel (0) target = $region13
    $region12: #{tpu_custom_call.1} parent=1 // pred_region
      _
    $region13: #{tpu_custom_call.1} parent=1 // pred_fallthru
      _
    %v15 = vld [vmem:[%s0] sm:$0xff]
    %v16 = vld [vmem:[%s0 + $0x8] sm:$0xff]
    %v17 = vld [vmem:[%s0 + $0x10] sm:$0xff]
    %v18 = vld [vmem:[%s0 + $0x18] sm:$0xff]
    %v19 = vld [vmem:[%s1] sm:$0xff]
    %v20 = vld [vmem:[%s1 + $0x8] sm:$0xff]
    %v21 = vld [vmem:[%s1 + $0x10] sm:$0xff]
    %v22 = vld [vmem:[%s1 + $0x18] sm:$0xff]
    %v23 = vld [vmem:[%s1 + $0x20] sm:$0xff]
    %v24 = vld [vmem:[%s1 + $0x28] sm:$0xff]
    %v25 = vld [vmem:[%s1 + $0x30] sm:$0xff]
    %v26 = vld [vmem:[%s1 + $0x38] sm:$0xff]
    %v27 = vld [vmem:[%s1 + $0x40] sm:$0xff]
    %v28 = vld [vmem:[%s1 + $0x48] sm:$0xff]
    %v29 = vld [vmem:[%s1 + $0x50] sm:$0xff]
    %v30 = vld [vmem:[%s1 + $0x58] sm:$0xff]
    %v31 = vld [vmem:[%s1 + $0x60] sm:$0xff]
    %v32 = vld [vmem:[%s1 + $0x68] sm:$0xff]
    %v33 = vld [vmem:[%s1 + $0x70] sm:$0xff]
    %v34 = vld [vmem:[%s1 + $0x78] sm:$0xff]
    %v35 = vld [vmem:[%s2] sm:$0xff]
    %v36 = vld [vmem:[%s2 + $0x8] sm:$0xff]
    %v37 = vld [vmem:[%s2 + $0x10] sm:$0xff]
    %v38 = vld [vmem:[%s2 + $0x18] sm:$0xff]
    %39 = vmatpush.msra.mxu0 %v34
    %40 = vmatpush.msra.mxu0 %v33
    %41 = vmatpush.msra.mxu0 %v32
    %42 = vmatpush.msra.mxu0 %v31
    %43 = vmatpush.msra.mxu0 %v30
    %44 = vmatpush.msra.mxu0 %v29
    %45 = vmatpush.msra.mxu0 %v28
    %46 = vmatpush.msra.mxu0 %v27
    %47 = vmatpush.msra.mxu0 %v26
    %48 = vmatpush.msra.mxu0 %v25
    %49 = vmatpush.msra.mxu0 %v24
    %50 = vmatpush.msra.mxu0 %v23
    %51 = vmatpush.msra.mxu0 %v22
    %52 = vmatpush.msra.mxu0 %v21
    %53 = vmatpush.msra.mxu0 %v20
    %54 = vmatpush.msra.mxu0 %v19
    %55 = vmatmul.f32.gmra.mxu0 %v15
    %v56 = vpop.f32.mrf.mxu0
    %v57 = vadd.f32 %v35, %v56
    %58 = vmatmul.f32.gmra.mxu0 %v16
    %v59 = vpop.f32.mrf.mxu0
    %v60 = vadd.f32 %v36, %v59
    %61 = vmatmul.f32.gmra.mxu0 %v17
    %v62 = vpop.f32.mrf.mxu0
    %v63 = vadd.f32 %v37, %v62
    %64 = vmatmul.f32.gmra.mxu0 %v18
    %v65 = vpop.f32.mrf.mxu0
    %v66 = vadd.f32 %v38, %v65
    %67 = vdwg.mxu0
    %vm68 = vcmask 261120
    %69 = vst.msk [vmem:[#allocation2] sm:$0xff] %vm68, %v57
    %70 = vst.msk [vmem:[#allocation2 + $0x8] sm:$0xff] %vm68, %v60
    %71 = vst.msk [vmem:[#allocation2 + $0x10] sm:$0xff] %vm68, %v63
    %72 = vst.msk [vmem:[#allocation2 + $0x18] sm:$0xff] %vm68, %v66
    // Predicated region
    $region14: #{tpu_custom_call.1} parent=1 // pred_check
      _
    $region15: #{tpu_custom_call.1} parent=1 // pred_check_branch
      %74 = sbr.rel (0) target = $region17
    $region16: #{tpu_custom_call.1} parent=1 // pred_region
      %76 = vsyncadd [#allocation3], 0
      %s77 = sshll.u32 [#allocation2], 4
      %s78 = int_to_ptr.vmem [resolvable:$true] %s77
      %s79 = sshll.u32 %s3, 4
      %s80 = int_to_ptr.hbm [resolvable:$true] %s79
      %85 = dma.vmem_to_hbm [thread:$0]  %s78, 512, %s80, [#allocation3], 128, 128, 8
    $region17: #{tpu_custom_call.1} parent=1 // pred_fallthru
      _
    // Predicated region
    $region18: #{tpu_custom_call.1} parent=1 // pred_check
      _
    $region19: #{tpu_custom_call.1} parent=1 // pred_check_branch
      %87 = sbr.rel (0) target = $region21
    $region20: #{tpu_custom_call.1} parent=1 // pred_region
      %89 = dma.done [#allocation3], 512
    $region21: #{tpu_custom_call.1} parent=1 // pred_fallthru
      _
    %90 = vsyncpa [#allocation3], 1

</llo_original>
